<compile_context>
chip_gen: v7x
topology: tpu7x:2x2x1
jax: 0.10.0
libtpu: 0.0.40
codegen_flags: <defaults>
</compile_context>

<pallas_src>
import numpy as np
import jax
import jax.numpy as jnp
from jax import lax
from jax.experimental import pallas as pl
from jax.experimental.pallas import tpu as pltpu


# ----------------------------------------------------------------------------
# Deterministic stand-in for meshzoo.uv_sphere (points only; faces unused here)
# ----------------------------------------------------------------------------
# TODO(synk): meshzoo is not available in-sandbox; this reproduces the uv-sphere
# point layout (poles + latitude circles) deterministically.
def uv_sphere_points(num_points_per_circle, num_circles, radius=1.0):
    n, m = num_points_per_circle, num_circles
    thetas = np.linspace(np.pi / (m - 1), np.pi - np.pi / (m - 1), m - 2)
    phis = np.linspace(0.0, 2.0 * np.pi, n, endpoint=False)
    pts = [[0.0, 0.0, radius]]
    for th in thetas:
        for ph in phis:
            pts.append([radius * np.sin(th) * np.cos(ph),
                        radius * np.sin(th) * np.sin(ph),
                        radius * np.cos(th)])
    pts.append([0.0, 0.0, -radius])
    return np.asarray(pts, dtype=np.float32)


def _round_up(x, m):
    return -(-x // m) * m


# ----------------------------------------------------------------------------
# Radial basis (reference / coefficient path): phi(r) = r^2 log r = 0.5 r2 log r2
# ----------------------------------------------------------------------------
def _tps_rbf(r2):
    return 0.5 * r2 * jnp.log(jnp.maximum(r2, 1e-10))


# ----------------------------------------------------------------------------
# Coefficient path (plain JAX, per perf review: at N=66 a Pallas launch costs
# more than the compute; the dense solve has no Pallas equivalent anyway).
# ----------------------------------------------------------------------------
def build_system(control_points, lambda_=0.0):
    c = control_points.astype(jnp.float32)
    N = c.shape[0]
    d2 = jnp.sum((c[:, None, :] - c[None, :, :]) ** 2, axis=-1)
    # Unconditional +lambda*I (avoids Python-truthiness trap on traced lambdas).
    K = _tps_rbf(d2) + jnp.float32(lambda_) * jnp.eye(N, dtype=jnp.float32)
    P = jnp.concatenate([jnp.ones((N, 1), jnp.float32), c], axis=1)         # (N, 4)
    top = jnp.concatenate([K, P], axis=1)                                    # (N, N+4)
    bot = jnp.concatenate([P.T, jnp.zeros((4, 4), jnp.float32)], axis=1)     # (4, N+4)
    return jnp.concatenate([top, bot], axis=0)                               # (N+4, N+4)


def find_coefficients(control_points, target_points, lambda_=0.0):
    L = build_system(control_points, lambda_)
    Y = jnp.concatenate([target_points.astype(jnp.float32),
                         jnp.zeros((4, 3), jnp.float32)], axis=0)            # (N+4, 3)
    # TODO(synk): the 'exact' dense (N+4)x(N+4) solve has no clean Pallas
    # equivalent; it stays in plain JAX.
    return jnp.linalg.solve(L, Y)                                            # (N+4, 3)


# ----------------------------------------------------------------------------
# Pallas kernel: fused TPS transform, transposed / lane-dense.
#   xa: (4, TM)     rows = [x, y, z, 1] of the flattened source points
#   ca: (Npad, 4)   rows = [-2x, -2y, -2z, |c|^2] per control point (zero rows
#                   for sublane-padding dummies)
#   wr: (3, Npad)   0.5 * RBF weights, transposed (zero cols for dummies)
#   wa: (3, 4)      [W_aff^T | w_bias]  (bias folded into the matmul via ones row)
#   out: (3, TM)    transposed result (lane-dense, unmasked stores)
# ----------------------------------------------------------------------------
def _tps_transform_kernel(xa_ref, ca_ref, wr_ref, wa_ref, out_ref):
    xa = xa_ref[...]                                              # (4, TM)
    x2 = jnp.sum(xa * xa, axis=0, keepdims=True) - 1.0            # (1, TM) = |x|^2
    r2 = lax.dot_general(ca_ref[...], xa, (((1,), (0,)), ((), ())),
                         preferred_element_type=jnp.float32)      # (Npad, TM)
    # Single fused clamp; eps keeps phi at r=0 (and any garbage tail lanes of a
    # partial final block) finite.
    r2 = jnp.maximum(r2 + x2, 1e-10)
    phi = r2 * jnp.log(r2)              # 0.5 of phi folded into wr (wrapper)
    out = lax.dot_general(wr_ref[...], phi, (((1,), (0,)), ((), ())),
                          preferred_element_type=jnp.float32)     # (3, TM)
    out = out + lax.dot_general(wa_ref[...], xa, (((1,), (0,)), ((), ())),
                                preferred_element_type=jnp.float32)
    out_ref[...] = out.astype(out_ref.dtype)


def tps_transform(source_points, control_points, coefficients, *, tile_m=8192):
    """source_points (B, M, 3), control_points (N, 3), coefficients (N+4, 3)."""
    B, M, _ = source_points.shape
    N = control_points.shape[0]
    BM = B * M

    # Lane-dense transposed source points with a ones row (folds the affine bias
    # and the |c|^2 term into the matmuls).
    # TODO(synk): in a larger pipeline keep producers/consumers in this (3, BM)
    # transposed layout so the two wrapper-side transposes disappear entirely.
    xT = source_points.reshape(BM, 3).T.astype(jnp.float32)                  # (3, BM)
    xa = jnp.concatenate([xT, jnp.ones((1, BM), jnp.float32)], axis=0)       # (4, BM)

    # Control points padded to a multiple of 8 sublanes with zero-weight dummies.
    Npad = max(8, _round_up(N, 8))
    c = control_points.astype(jnp.float32)
    c2 = jnp.sum(c * c, axis=1, keepdims=True)
    ca = jnp.pad(jnp.concatenate([-2.0 * c, c2], axis=1),
                 ((0, Npad - N), (0, 0)))                                    # (Npad, 4)

    w = coefficients.astype(jnp.float32)
    # Fold the 0.5 of phi(r) = 0.5 r^2 log r^2 into the RBF weights.
    wr = 0.5 * jnp.pad(w[:N], ((0, Npad - N), (0, 0))).T                     # (3, Npad)
    wa = jnp.concatenate([w[N + 1:], w[N:N + 1]], axis=0).T                  # (3, 4)

    # Lane-tile selection:
    #  * big tiles (default 8192 lanes) amortize the ~0.35us per-grid-step cost;
    #    the (Npad, tm) phi intermediate plus double-buffered I/O is ~3 MiB,
    #    comfortable on v5e/v6e (128 MiB) and v7x (64 MiB) VMEM.
    #  * for BM >= 1024 cap the tile so there are always >= 2 "parallel" tiles
    #    and v7x's two TensorCores both get work (no-op on v5e/v6e).
    #  * no input padding: a ragged final tile uses Pallas partial blocks
    #    (masked boundary store discards the tail lanes).
    if BM >= 1024:
        tm = max(512, min(tile_m, _round_up(pl.cdiv(BM, 2), 512)))
    else:
        tm = BM                       # single tiny tile; compute is negligible
    grid = (pl.cdiv(BM, tm),)

    outT = pl.pallas_call(
        _tps_transform_kernel,
        out_shape=jax.ShapeDtypeStruct((3, BM), jnp.float32),
        grid=grid,
        in_specs=[
            pl.BlockSpec((4, tm), lambda i: (0, i)),
            pl.BlockSpec((Npad, 4), lambda i: (0, 0)),
            pl.BlockSpec((3, Npad), lambda i: (0, 0)),
            pl.BlockSpec((3, 4), lambda i: (0, 0)),
        ],
        out_specs=pl.BlockSpec((3, tm), lambda i: (0, i)),
        compiler_params=pltpu.CompilerParams(
            dimension_semantics=("parallel",)),   # v7x: both TCs split tiles
    )(xa, ca, wr, wa)

    return outT.T.reshape(B, M, 3)


# ----------------------------------------------------------------------------
# Module equivalent
# ----------------------------------------------------------------------------
class TPSPallas:
    def __init__(self, resolution, lambda_=0.0, key=None):
        pts = uv_sphere_points(num_points_per_circle=resolution,
                               num_circles=resolution + 2, radius=1.0)
        self.sphere_points = jnp.asarray(pts, dtype=jnp.float32)   # buffer
        # Parameter: deterministic small perturbation so the warp is non-trivial.
        if key is not None:
            self.points = self.sphere_points + 0.05 * jax.random.normal(
                key, pts.shape, dtype=jnp.float32)
        else:
            self.points = self.sphere_points
        self.lambda_ = float(lambda_)
        self._coeff = None   # coefficients depend only on static params -> cache

    def coefficients(self):
        if self._coeff is None:
            self._coeff = find_coefficients(self.points, self.sphere_points,
                                            self.lambda_)
        return self._coeff

    def __call__(self, source_points):
        return tps_transform(source_points, self.points, self.coefficients())


# ----------------------------------------------------------------------------
# Pure-JAX references for verification
# ----------------------------------------------------------------------------
def _transform_ref(x, c, w):
    B, M, _ = x.shape
    phi = _tps_rbf(jnp.sum((x[:, :, None, :] - c[None, None, :, :]) ** 2, -1))
    aug = jnp.concatenate([phi, jnp.ones((B, M, 1), jnp.float32), x], axis=-1)
    return jnp.einsum("bmn,nd->bmd", aug, w)


if __name__ == "__main__":
    resolution = 8                      # -> N = 8*8 + 2 = 66 control points
    B, M = 2, 64                        # BM = 128: single lane-dense tile

    key = jax.random.PRNGKey(0)
    k_param, k_src, k_src2 = jax.random.split(key, 3)

    model = TPSPallas(resolution=resolution, lambda_=0.0, key=k_param)

    src = jax.random.normal(k_src, (B, M, 3), dtype=jnp.float32)
    src = src / jnp.linalg.norm(src, axis=-1, keepdims=True)   # near unit sphere

    out = model(src)
    out = jax.block_until_ready(out)
    assert out.shape == (B, M, 3) and out.dtype == jnp.float32

    coeff = model.coefficients()
    out_ref = _transform_ref(src, model.points, coeff)
    np.testing.assert_allclose(np.asarray(out), np.asarray(out_ref),
                               rtol=1e-3, atol=1e-3)

    # Second check: multi-tile "parallel" grid with a ragged (partial) last tile
    # (BM = 1280 -> tm = 1024, grid = 2, second tile only 256 lanes valid).
    M2 = 640
    src2 = jax.random.normal(k_src2, (B, M2, 3), dtype=jnp.float32)
    src2 = src2 / jnp.linalg.norm(src2, axis=-1, keepdims=True)
    out2 = jax.block_until_ready(model(src2))
    out2_ref = _transform_ref(src2, model.points, coeff)
    np.testing.assert_allclose(np.asarray(out2), np.asarray(out2_ref),
                               rtol=1e-3, atol=1e-3)

    print("KERNEL_OK")
</pallas_src>

<mosaic_0001>
module attributes {stable_mosaic.version = 11 : i64} {
  func.func @_tps_transform_kernel(%arg0: i32, %arg1: memref<4x128xf32, #tpu.memory_space<vmem>>, %arg2: memref<72x4xf32, #tpu.memory_space<vmem>>, %arg3: memref<3x72xf32, #tpu.memory_space<vmem>>, %arg4: memref<3x4xf32, #tpu.memory_space<vmem>>, %arg5: memref<3x128xf32, #tpu.memory_space<vmem>>) attributes {dimension_semantics = [#tpu.dimension_semantics<parallel>], iteration_bounds = array<i64: 1>, scalar_prefetch = 0 : i64, scratch_operands = 0 : i64, tpu.core_type = #tpu.core_type<tc>, window_params = [{transform_indices = @transform_0, window_bounds = array<i64: 4, 128>}, {pipeline_mode = #tpu.pipeline_mode<synchronous>, transform_indices = @transform_1, window_bounds = array<i64: 72, 4>}, {pipeline_mode = #tpu.pipeline_mode<synchronous>, transform_indices = @transform_2, window_bounds = array<i64: 3, 72>}, {pipeline_mode = #tpu.pipeline_mode<synchronous>, transform_indices = @transform_3, window_bounds = array<i64: 3, 4>}, {transform_indices = @transform_4, window_bounds = array<i64: 3, 128>}]} {
    %c0 = arith.constant 0 : index
    %c0_0 = arith.constant 0 : index
    %0 = vector.load %arg1[%c0, %c0_0] : memref<4x128xf32, #tpu.memory_space<vmem>>, vector<4x128xf32>
    %1 = arith.mulf %0, %0 : vector<4x128xf32>
    %cst = arith.constant dense<0.000000e+00> : vector<128xf32>
    %2 = vector.multi_reduction <add>, %1, %cst [0] : vector<4x128xf32> to vector<128xf32>
    %3 = vector.shape_cast %2 : vector<128xf32> to vector<1x128xf32>
    %cst_1 = arith.constant 1.000000e+00 : f32
    %4 = vector.broadcast %cst_1 : f32 to vector<1x128xf32>
    %5 = arith.subf %3, %4 : vector<1x128xf32>
    %c0_2 = arith.constant 0 : index
    %c0_3 = arith.constant 0 : index
    %6 = vector.load %arg2[%c0_2, %c0_3] : memref<72x4xf32, #tpu.memory_space<vmem>>, vector<72x4xf32>
    %cst_4 = arith.constant dense<0.000000e+00> : vector<72x128xf32>
    %7 = tpu.matmul %6, %0, %cst_4 {dimension_numbers = #tpu.dot_dimension_numbers<[1], [0], [0], [1], [0, 0, 1, 1], [], []>} : vector<72x4xf32>, vector<4x128xf32>, vector<72x128xf32> -> vector<72x128xf32>
    %8 = vector.broadcast %5 : vector<1x128xf32> to vector<72x128xf32>
    %9 = arith.addf %7, %8 : vector<72x128xf32>
    %cst_5 = arith.constant 1.000000e-10 : f32
    %10 = vector.broadcast %cst_5 : f32 to vector<72x128xf32>
    %11 = arith.maximumf %9, %10 : vector<72x128xf32>
    %12 = math.log %11 : vector<72x128xf32>
    %13 = arith.mulf %11, %12 : vector<72x128xf32>
    %c0_6 = arith.constant 0 : index
    %c0_7 = arith.constant 0 : index
    %14 = vector.load %arg3[%c0_6, %c0_7] : memref<3x72xf32, #tpu.memory_space<vmem>>, vector<3x72xf32>
    %cst_8 = arith.constant dense<0.000000e+00> : vector<3x128xf32>
    %15 = tpu.matmul %14, %13, %cst_8 {dimension_numbers = #tpu.dot_dimension_numbers<[1], [0], [0], [1], [0, 0, 1, 1], [], []>} : vector<3x72xf32>, vector<72x128xf32>, vector<3x128xf32> -> vector<3x128xf32>
    %c0_9 = arith.constant 0 : index
    %c0_10 = arith.constant 0 : index
    %16 = vector.load %arg4[%c0_9, %c0_10] : memref<3x4xf32, #tpu.memory_space<vmem>>, vector<3x4xf32>
    %cst_11 = arith.constant dense<0.000000e+00> : vector<3x128xf32>
    %17 = tpu.matmul %16, %0, %cst_11 {dimension_numbers = #tpu.dot_dimension_numbers<[1], [0], [0], [1], [0, 0, 1, 1], [], []>} : vector<3x4xf32>, vector<4x128xf32>, vector<3x128xf32> -> vector<3x128xf32>
    %18 = arith.addf %15, %17 : vector<3x128xf32>
    %c0_12 = arith.constant 0 : index
    %c0_13 = arith.constant 0 : index
    %19 = vector.load %arg5[%c0_12, %c0_13] : memref<3x128xf32, #tpu.memory_space<vmem>>, vector<3x128xf32>
    tpu.vector_store %arg5[%c0_12, %c0_13], %18 {strides = array<i32>} : memref<3x128xf32, #tpu.memory_space<vmem>>, vector<3x128xf32>,
    return
  }
  func.func @transform_0(%arg0: i32) -> (i32, i32) {
    %c0_i32 = arith.constant 0 : i32
    %c0_i32_0 = arith.constant 0 : i32
    return %c0_i32, %arg0 : i32, i32
  }
  func.func @transform_1(%arg0: i32) -> (i32, i32) {
    %c0_i32 = arith.constant 0 : i32
    %c0_i32_0 = arith.constant 0 : i32
    %c0_i32_1 = arith.constant 0 : i32
    return %c0_i32, %c0_i32_0 : i32, i32
  }
  func.func @transform_2(%arg0: i32) -> (i32, i32) {
    %c0_i32 = arith.constant 0 : i32
    %c0_i32_0 = arith.constant 0 : i32
    %c0_i32_1 = arith.constant 0 : i32
    return %c0_i32, %c0_i32_0 : i32, i32
  }
  func.func @transform_3(%arg0: i32) -> (i32, i32) {
    %c0_i32 = arith.constant 0 : i32
    %c0_i32_0 = arith.constant 0 : i32
    %c0_i32_1 = arith.constant 0 : i32
    return %c0_i32, %c0_i32_0 : i32, i32
  }
  func.func @transform_4(%arg0: i32) -> (i32, i32) {
    %c0_i32 = arith.constant 0 : i32
    %c0_i32_0 = arith.constant 0 : i32
    return %c0_i32, %arg0 : i32, i32
  }
}

</mosaic_0001>

<llo_original>
// kernel: tpu_custom_call.1
$region0: #{tpu_custom_call.1}
  #allocation0 [shape = 'u32[]', space=smem, size = 0x4, offset = 0x4, fixed_abs, tag = 'smem constant byte address 0x4 - core index']
  #allocation1 [shape = 'u32[144,128]{1,0:T(1,128)}', space=vmem, size = 0x12000, scoped, tag = 'internal scratch']
  %s0 = inlined_call_operand.vmem [shape: f32[4,128], index: 0, kind: input, shape index: {}]
  %s1 = inlined_call_operand.vmem [shape: f32[72,4], index: 1, kind: input, shape index: {}]
  %s2 = inlined_call_operand.vmem [shape: f32[3,72], index: 2, kind: input, shape index: {}]
  %s3 = inlined_call_operand.vmem [shape: f32[3,4], index: 3, kind: input, shape index: {}]
  %s4 = inlined_call_operand.hbm [shape: f32[3,128], index: 4, kind: output, shape index: {}]
  %s5 = sld [smem:[#allocation0]]
  $region26: #{tpu_custom_call.1} parent=0
    _
  %s7 = ssub.s32 1, %s5
  %s8 = scalar_select 0, %s7, %s5
  $region1: #{tpu_custom_call.1} parent=0
    #allocation2 [shape = 'u8[2048]{0}', space=vmem, size = 0x800, scoped, tag = 'output window, operand 0, single buffered']
    #allocation3 [shape = 's32[1]{0}', space=sflag, size = 0x4, scoped, tag = 'scoped memory for tpu_custom_call.1']
    %9 = vsyncpa [#allocation3], 0
    // Predicated region
    $region2: #{tpu_custom_call.1} parent=1 // pred_check
      _
    $region3: #{tpu_custom_call.1} parent=1 // pred_check_branch
      %11 = sbr.rel (0) target = $region5
    $region4: #{tpu_custom_call.1} parent=1 // pred_region
      _
    $region5: #{tpu_custom_call.1} parent=1 // pred_fallthru
      _
    // Predicated region
    $region6: #{tpu_custom_call.1} parent=1 // pred_check
      _
    $region7: #{tpu_custom_call.1} parent=1 // pred_check_branch
      %13 = sbr.rel (0) target = $region9
    $region8: #{tpu_custom_call.1} parent=1 // pred_region
      _
    $region9: #{tpu_custom_call.1} parent=1 // pred_fallthru
      _
    // Predicated region
    $region10: #{tpu_custom_call.1} parent=1 // pred_check
      _
    $region11: #{tpu_custom_call.1} parent=1 // pred_check_branch
      %15 = sbr.rel (0) target = $region13
    $region12: #{tpu_custom_call.1} parent=1 // pred_region
      _
    $region13: #{tpu_custom_call.1} parent=1 // pred_fallthru
      _
    // Predicated region
    $region14: #{tpu_custom_call.1} parent=1 // pred_check
      _
    $region15: #{tpu_custom_call.1} parent=1 // pred_check_branch
      %17 = sbr.rel (0) target = $region17
    $region16: #{tpu_custom_call.1} parent=1 // pred_region
      _
    $region17: #{tpu_custom_call.1} parent=1 // pred_fallthru
      _
    %v18 = vld [vmem:[%s0] sm:$0xf]
    %v19 = vmul.f32 %v18, %v18
    %vm20 = vcmask 1043456
    %v21 = vsel %vm20, %v19, 0.0
    %v22 = vrot.slane %v21, 4
    %v23 = vadd.f32 %v21, %v22
    %v24 = vrot.slane %v23, 2
    %v25 = vadd.f32 %v23, %v24
    %v26 = vrot.slane %v25, 1
    %v27 = vadd.f32 %v25, %v26
    %v28 = vsub.f32 %v27, 1.0
    %v29 = vld [vmem:[%s1] sm:$0xff]
    %v30 = vld [vmem:[%s1 + $0x8] sm:$0xff]
    %v31 = vld [vmem:[%s1 + $0x10] sm:$0xff]
    %v32 = vld [vmem:[%s1 + $0x18] sm:$0xff]
    %v33 = vld [vmem:[%s1 + $0x20] sm:$0xff]
    %v34 = vld [vmem:[%s1 + $0x28] sm:$0xff]
    %v35 = vld [vmem:[%s1 + $0x30] sm:$0xff]
    %v36 = vld [vmem:[%s1 + $0x38] sm:$0xff]
    %v37 = vld [vmem:[%s1 + $0x40] sm:$0xff]
    %vm38 = vcmask 31744
    %v40 = vsel %vm38, %v29, 0
    %v43 = vsel %vm38, %v30, 0
    %v46 = vsel %vm38, %v31, 0
    %v49 = vsel %vm38, %v32, 0
    %v52 = vsel %vm38, %v33, 0
    %v55 = vsel %vm38, %v34, 0
    %v58 = vsel %vm38, %v35, 0
    %v61 = vsel %vm38, %v36, 0
    %v64 = vsel %vm38, %v37, 0
    %v67 = vsel %vm20, %v18, 0
    %69 = vmatprep.subr.mxu0 0.0
    %70 = vmatpush1.msra.mxu0 %v67
    %71 = vmatprep.subr.mxu0 0.0
    %72 = vmatpush1.msra.mxu0 0.0
    %73 = vmatprep.subr.mxu0 0.0
    %74 = vmatpush1.msra.mxu0 0.0
    %75 = vmatprep.subr.mxu0 0.0
    %76 = vmatpush1.msra.mxu0 0.0
    %77 = vmatprep.subr.mxu0 0.0
    %78 = vmatpush1.msra.mxu0 0.0
    %79 = vmatprep.subr.mxu0 0.0
    %80 = vmatpush1.msra.mxu0 0.0
    %81 = vmatprep.subr.mxu0 0.0
    %82 = vmatpush1.msra.mxu0 0.0
    %83 = vmatprep.subr.mxu0 0.0
    %84 = vmatpush1.msra.mxu0 0.0
    %85 = vmatprep.subr.mxu0 0.0
    %86 = vmatpush1.msra.mxu0 0.0
    %87 = vmatprep.subr.mxu0 0.0
    %88 = vmatpush1.msra.mxu0 0.0
    %89 = vmatprep.subr.mxu0 0.0
    %90 = vmatpush1.msra.mxu0 0.0
    %91 = vmatprep.subr.mxu0 0.0
    %92 = vmatpush1.msra.mxu0 0.0
    %93 = vmatprep.subr.mxu0 0.0
    %94 = vmatpush1.msra.mxu0 0.0
    %95 = vmatprep.subr.mxu0 0.0
    %96 = vmatpush1.msra.mxu0 0.0
    %97 = vmatprep.subr.mxu0 0.0
    %98 = vmatpush1.msra.mxu0 0.0
    %99 = vmatprep.subr.mxu0 0.0
    %100 = vmatpush1.msra.mxu0 0.0
    %101 = vmatprep.subr.mxu0 0.0
    %102 = vmatpush1.msra.mxu0 0.0
    %103 = vmatprep.subr.mxu0 0.0
    %104 = vmatpush1.msra.mxu0 0.0
    %105 = vmatprep.subr.mxu0 0.0
    %106 = vmatpush1.msra.mxu0 0.0
    %107 = vmatprep.subr.mxu0 0.0
    %108 = vmatpush1.msra.mxu0 0.0
    %109 = vmatprep.subr.mxu0 0.0
    %110 = vmatpush1.msra.mxu0 0.0
    %111 = vmatprep.subr.mxu0 0.0
    %112 = vmatpush1.msra.mxu0 0.0
    %113 = vmatprep.subr.mxu0 0.0
    %114 = vmatpush1.msra.mxu0 0.0
    %115 = vmatprep.subr.mxu0 0.0
    %116 = vmatpush1.msra.mxu0 0.0
    %117 = vmatprep.subr.mxu0 0.0
    %118 = vmatpush1.msra.mxu0 0.0
    %119 = vmatprep.subr.mxu0 0.0
    %120 = vmatpush1.msra.mxu0 0.0
    %121 = vmatprep.subr.mxu0 0.0
    %122 = vmatpush1.msra.mxu0 0.0
    %123 = vmatprep.subr.mxu0 0.0
    %124 = vmatpush1.msra.mxu0 0.0
    %125 = vmatprep.subr.mxu0 0.0
    %126 = vmatpush1.msra.mxu0 0.0
    %127 = vmatprep.subr.mxu0 0.0
    %128 = vmatpush1.msra.mxu0 0.0
    %129 = vmatprep.subr.mxu0 0.0
    %130 = vmatpush1.msra.mxu0 0.0
    %131 = vmatprep.subr.mxu0 0.0
    %132 = vmatpush1.msra.mxu0 0.0
    %133 = vmatprep.mubr.f32.mxu0 0.0
    %134 = vmatmul.mubr.f32.gmra.mrb[0].mxu0 %v40
    %v135 = vpop.f32.mrb[0].mxu0
    %v136 = vadd.f32 %v28, %v135
    %v137 = vpop.f32.mrb[0].mxu0
    %138 = vmatprep.mubr.f32.mxu0 0.0
    %139 = vmatmul.mubr.f32.gmra.mrb[0].mxu0 %v43
    %v140 = vpop.f32.mrb[0].mxu0
    %v141 = vadd.f32 %v28, %v140
    %v142 = vpop.f32.mrb[0].mxu0
    %143 = vmatprep.mubr.f32.mxu0 0.0
    %144 = vmatmul.mubr.f32.gmra.mrb[0].mxu0 %v46
    %v145 = vpop.f32.mrb[0].mxu0
    %v146 = vadd.f32 %v28, %v145
    %v147 = vpop.f32.mrb[0].mxu0
    %148 = vmatprep.mubr.f32.mxu0 0.0
    %149 = vmatmul.mubr.f32.gmra.mrb[0].mxu0 %v49
    %v150 = vpop.f32.mrb[0].mxu0
    %v151 = vadd.f32 %v28, %v150
    %v152 = vpop.f32.mrb[0].mxu0
    %153 = vmatprep.mubr.f32.mxu0 0.0
    %154 = vmatmul.mubr.f32.gmra.mrb[0].mxu0 %v52
    %v155 = vpop.f32.mrb[0].mxu0
    %v156 = vadd.f32 %v28, %v155
    %v157 = vpop.f32.mrb[0].mxu0
    %158 = vmatprep.mubr.f32.mxu0 0.0
    %159 = vmatmul.mubr.f32.gmra.mrb[0].mxu0 %v55
    %v160 = vpop.f32.mrb[0].mxu0
    %v161 = vadd.f32 %v28, %v160
    %v162 = vpop.f32.mrb[0].mxu0
    %163 = vmatprep.mubr.f32.mxu0 0.0
    %164 = vmatmul.mubr.f32.gmra.mrb[0].mxu0 %v58
    %v165 = vpop.f32.mrb[0].mxu0
    %v166 = vadd.f32 %v28, %v165
    %v167 = vpop.f32.mrb[0].mxu0
    %168 = vmatprep.mubr.f32.mxu0 0.0
    %169 = vmatmul.mubr.f32.gmra.mrb[0].mxu0 %v61
    %v170 = vpop.f32.mrb[0].mxu0
    %v171 = vadd.f32 %v28, %v170
    %v172 = vpop.f32.mrb[0].mxu0
    %173 = vmatprep.mubr.f32.mxu0 0.0
    %174 = vmatmul.mubr.f32.gmra.mrb[0].mxu0 %v64
    %v175 = vpop.f32.mrb[0].mxu0
    %v176 = vadd.f32 %v28, %v175
    %v177 = vpop.f32.mrb[0].mxu0
    %178 = vdwg.mxu0
    %v179 = vmax.f32 %v136, 1e-10
    %v180 = vmax.f32 %v141, 1e-10
    %v181 = vmax.f32 %v146, 1e-10
    %v182 = vmax.f32 %v151, 1e-10
    %v183 = vmax.f32 %v156, 1e-10
    %v184 = vmax.f32 %v161, 1e-10
    %v185 = vmax.f32 %v166, 1e-10
    %v186 = vmax.f32 %v171, 1e-10
    %v187 = vmax.f32 %v176, 1e-10
    %v188 = vlog2.pop %v179
    %v189 = vmul.f32 %v188, 0.6931472
    %v190 = vlog2.pop %v180
    %v191 = vmul.f32 %v190, 0.6931472
    %v192 = vlog2.pop %v181
    %v193 = vmul.f32 %v192, 0.6931472
    %v194 = vlog2.pop %v182
    %v195 = vmul.f32 %v194, 0.6931472
    %v196 = vlog2.pop %v183
    %v197 = vmul.f32 %v196, 0.6931472
    %v198 = vlog2.pop %v184
    %v199 = vmul.f32 %v198, 0.6931472
    %v200 = vlog2.pop %v185
    %v201 = vmul.f32 %v200, 0.6931472
    %v202 = vlog2.pop %v186
    %v203 = vmul.f32 %v202, 0.6931472
    %v204 = vlog2.pop %v187
    %v205 = vmul.f32 %v204, 0.6931472
    %v206 = vmul.f32 %v179, %v189
    %v207 = vmul.f32 %v180, %v191
    %v208 = vmul.f32 %v181, %v193
    %v209 = vmul.f32 %v182, %v195
    %v210 = vmul.f32 %v183, %v197
    %v211 = vmul.f32 %v184, %v199
    %v212 = vmul.f32 %v185, %v201
    %v213 = vmul.f32 %v186, %v203
    %v214 = vmul.f32 %v187, %v205
    %v215 = vld [vmem:[%s2] sm:$0x7]
    %v216 = vld [vmem:[%s3] sm:$0x7]
    %v218 = vsel %vm38, %v216, 0
    %220 = vmatprep.subr.mxu0 0.0
    %221 = vmatpush1.msra.mxu0 %v67
    %222 = vmatprep.subr.mxu0 0.0
    %223 = vmatpush1.msra.mxu0 0.0
    %224 = vmatprep.subr.mxu0 0.0
    %225 = vmatpush1.msra.mxu0 0.0
    %226 = vmatprep.subr.mxu0 0.0
    %227 = vmatpush1.msra.mxu0 0.0
    %228 = vmatprep.subr.mxu0 0.0
    %229 = vmatpush1.msra.mxu0 0.0
    %230 = vmatprep.subr.mxu0 0.0
    %231 = vmatpush1.msra.mxu0 0.0
    %232 = vmatprep.subr.mxu0 0.0
    %233 = vmatpush1.msra.mxu0 0.0
    %234 = vmatprep.subr.mxu0 0.0
    %235 = vmatpush1.msra.mxu0 0.0
    %236 = vmatprep.subr.mxu0 0.0
    %237 = vmatpush1.msra.mxu0 0.0
    %238 = vmatprep.subr.mxu0 0.0
    %239 = vmatpush1.msra.mxu0 0.0
    %240 = vmatprep.subr.mxu0 0.0
    %241 = vmatpush1.msra.mxu0 0.0
    %242 = vmatprep.subr.mxu0 0.0
    %243 = vmatpush1.msra.mxu0 0.0
    %244 = vmatprep.subr.mxu0 0.0
    %245 = vmatpush1.msra.mxu0 0.0
    %246 = vmatprep.subr.mxu0 0.0
    %247 = vmatpush1.msra.mxu0 0.0
    %248 = vmatprep.subr.mxu0 0.0
    %249 = vmatpush1.msra.mxu0 0.0
    %250 = vmatprep.subr.mxu0 0.0
    %251 = vmatpush1.msra.mxu0 0.0
    %252 = vmatprep.subr.mxu0 0.0
    %253 = vmatpush1.msra.mxu0 0.0
    %254 = vmatprep.subr.mxu0 0.0
    %255 = vmatpush1.msra.mxu0 0.0
    %256 = vmatprep.subr.mxu0 0.0
    %257 = vmatpush1.msra.mxu0 0.0
    %258 = vmatprep.subr.mxu0 0.0
    %259 = vmatpush1.msra.mxu0 0.0
    %260 = vmatprep.subr.mxu0 0.0
    %261 = vmatpush1.msra.mxu0 0.0
    %262 = vmatprep.subr.mxu0 0.0
    %263 = vmatpush1.msra.mxu0 0.0
    %264 = vmatprep.subr.mxu0 0.0
    %265 = vmatpush1.msra.mxu0 0.0
    %266 = vmatprep.subr.mxu0 0.0
    %267 = vmatpush1.msra.mxu0 0.0
    %268 = vmatprep.subr.mxu0 0.0
    %269 = vmatpush1.msra.mxu0 0.0
    %270 = vmatprep.subr.mxu0 0.0
    %271 = vmatpush1.msra.mxu0 0.0
    %272 = vmatprep.subr.mxu0 0.0
    %273 = vmatpush1.msra.mxu0 0.0
    %274 = vmatprep.subr.mxu0 0.0
    %275 = vmatpush1.msra.mxu0 0.0
    %276 = vmatprep.subr.mxu0 0.0
    %277 = vmatpush1.msra.mxu0 0.0
    %278 = vmatprep.subr.mxu0 0.0
    %279 = vmatpush1.msra.mxu0 0.0
    %280 = vmatprep.subr.mxu0 0.0
    %281 = vmatpush1.msra.mxu0 0.0
    %282 = vmatprep.subr.mxu0 0.0
    %283 = vmatpush1.msra.mxu0 0.0
    %284 = vmatprep.mubr.f32.mxu0 0.0
    %285 = vmatmul.mubr.f32.gmra.mrb[0].mxu0 %v218
    %v286 = vpop.f32.mrb[0].mxu0
    %v287 = vadd.f32 0.0, %v286
    %v288 = vpop.f32.mrb[0].mxu0
    %289 = vdwg.mxu0
    %vm290 = vcmask 588800
    %v292 = vsel %vm290, %v215, 0
    %294 = vmatprep.subr.mxu0 0.0
    %295 = vmatpush1.msra.mxu0 %v206
    %296 = vmatprep.subr.mxu0 0.0
    %297 = vmatpush1.msra.mxu0 %v207
    %298 = vmatprep.subr.mxu0 0.0
    %299 = vmatpush1.msra.mxu0 %v208
    %300 = vmatprep.subr.mxu0 0.0
    %301 = vmatpush1.msra.mxu0 %v209
    %302 = vmatprep.subr.mxu0 0.0
    %303 = vmatpush1.msra.mxu0 %v210
    %304 = vmatprep.subr.mxu0 0.0
    %305 = vmatpush1.msra.mxu0 %v211
    %306 = vmatprep.subr.mxu0 0.0
    %307 = vmatpush1.msra.mxu0 %v212
    %308 = vmatprep.subr.mxu0 0.0
    %309 = vmatpush1.msra.mxu0 %v213
    %310 = vmatprep.subr.mxu0 0.0
    %311 = vmatpush1.msra.mxu0 %v214
    %312 = vmatprep.subr.mxu0 0.0
    %313 = vmatpush1.msra.mxu0 0.0
    %314 = vmatprep.subr.mxu0 0.0
    %315 = vmatpush1.msra.mxu0 0.0
    %316 = vmatprep.subr.mxu0 0.0
    %317 = vmatpush1.msra.mxu0 0.0
    %318 = vmatprep.subr.mxu0 0.0
    %319 = vmatpush1.msra.mxu0 0.0
    %320 = vmatprep.subr.mxu0 0.0
    %321 = vmatpush1.msra.mxu0 0.0
    %322 = vmatprep.subr.mxu0 0.0
    %323 = vmatpush1.msra.mxu0 0.0
    %324 = vmatprep.subr.mxu0 0.0
    %325 = vmatpush1.msra.mxu0 0.0
    %326 = vmatprep.subr.mxu0 0.0
    %327 = vmatpush1.msra.mxu0 0.0
    %328 = vmatprep.subr.mxu0 0.0
    %329 = vmatpush1.msra.mxu0 0.0
    %330 = vmatprep.subr.mxu0 0.0
    %331 = vmatpush1.msra.mxu0 0.0
    %332 = vmatprep.subr.mxu0 0.0
    %333 = vmatpush1.msra.mxu0 0.0
    %334 = vmatprep.subr.mxu0 0.0
    %335 = vmatpush1.msra.mxu0 0.0
    %336 = vmatprep.subr.mxu0 0.0
    %337 = vmatpush1.msra.mxu0 0.0
    %338 = vmatprep.subr.mxu0 0.0
    %339 = vmatpush1.msra.mxu0 0.0
    %340 = vmatprep.subr.mxu0 0.0
    %341 = vmatpush1.msra.mxu0 0.0
    %342 = vmatprep.subr.mxu0 0.0
    %343 = vmatpush1.msra.mxu0 0.0
    %344 = vmatprep.subr.mxu0 0.0
    %345 = vmatpush1.msra.mxu0 0.0
    %346 = vmatprep.subr.mxu0 0.0
    %347 = vmatpush1.msra.mxu0 0.0
    %348 = vmatprep.subr.mxu0 0.0
    %349 = vmatpush1.msra.mxu0 0.0
    %350 = vmatprep.subr.mxu0 0.0
    %351 = vmatpush1.msra.mxu0 0.0
    %352 = vmatprep.subr.mxu0 0.0
    %353 = vmatpush1.msra.mxu0 0.0
    %354 = vmatprep.subr.mxu0 0.0
    %355 = vmatpush1.msra.mxu0 0.0
    %356 = vmatprep.subr.mxu0 0.0
    %357 = vmatpush1.msra.mxu0 0.0
    %358 = vmatprep.mubr.f32.mxu0 0.0
    %359 = vmatmul.mubr.f32.gmra.mrb[0].mxu0 %v292
    %v360 = vpop.f32.mrb[0].mxu0
    %v361 = vadd.f32 %v287, %v360
    %v362 = vpop.f32.mrb[0].mxu0
    %363 = vdwg.mxu0
    %364 = vst [vmem:[#allocation2] sm:$0x7] %v361
    // Predicated region
    $region18: #{tpu_custom_call.1} parent=1 // pred_check
      _
    $region19: #{tpu_custom_call.1} parent=1 // pred_check_branch
      %366 = sbr.rel (0) target = $region21
    $region20: #{tpu_custom_call.1} parent=1 // pred_region
      %s368 = ssub.s32 64, 64
      %369 = vsyncadd [#allocation3], %s368
      %s371 = sshll.u32 [#allocation2], 4
      %s372 = int_to_ptr.vmem [resolvable:$true] %s371
      %374 = dma.vmem_to_hbm [thread:$0]  %s372, 64, %s4, [#allocation3]
    $region21: #{tpu_custom_call.1} parent=1 // pred_fallthru
      _
    // Predicated region
    $region22: #{tpu_custom_call.1} parent=1 // pred_check
      _
    $region23: #{tpu_custom_call.1} parent=1 // pred_check_branch
      %376 = sbr.rel (0) target = $region25
    $region24: #{tpu_custom_call.1} parent=1 // pred_region
      %377 = dma.done [#allocation3], 64
    $region25: #{tpu_custom_call.1} parent=1 // pred_fallthru
      _
    %378 = vsyncpa [#allocation3], 1

</llo_original>
